<compile_context>
chip_gen: v5e
topology: v5e:2x2
jax: 0.10.0
libtpu: 0.0.40
codegen_flags: <defaults>
</compile_context>

<pallas_src>
import functools

import jax
import jax.numpy as jnp
from jax.experimental import pallas as pl
from jax.experimental.pallas import tpu as pltpu


# ----------------------------- Pallas kernel ------------------------------- #

def _fused_cont_conv2d_kernel(
    x_ref,       # (Cin, FLAT)         flattened padded image (one batch elem)
    w_ref,       # (KH*KW, Cout, Cin)  BN-scale-folded conv weights, (ki,kj) major
    shift_ref,   # (Cout, 1)           folded BN shift (+ conv bias)
    o_ref,       # (Cout, rows*Wp)     lane-dense output band
    *,
    KH, KW, Wp, stride, rows_per_band, num_bands,
    z_coef, tanh_biases, half_scales, q_const,
):
    cout, L = o_ref.shape

    if num_bands == 1:
        base = 0                                     # fully static slices
    else:
        band = pl.program_id(1)
        base = pl.multiple_of(band * (rows_per_band * stride * Wp),
                              rows_per_band * stride * Wp)

    # ---- fused im2col + conv: KH*KW shifted matmuls on the MXU ----
    # acc[cout, r*Wp + c] += sum_cin w'[ki,kj,cout,cin] * x_p[cin, r*s+ki, c*s+kj]
    acc = jnp.zeros((cout, L), jnp.float32)
    for ki in range(KH):
        for kj in range(KW):
            off = base + ki * Wp + kj
            if stride == 1:
                xs = x_ref[:, pl.ds(off, L)]                 # (Cin, L)
            else:
                xs = x_ref[:, pl.ds(off, L, stride)]
            acc = acc + jnp.dot(w_ref[ki * KW + kj], xs,
                                preferred_element_type=jnp.float32)

    # ---- folded BatchNorm (eval, eps=1e-3) shift + conv bias, then ReLU ----
    # (BN scale already folded into the weights in the wrapper.)
    y = jnp.maximum(acc + shift_ref[...], 0.0)

    # ---- continuous quantization: sum of sigmoids in 1-EUP-op tanh form ----
    z = z_coef * y
    q = q_const                                      # scalar, broadcasts
    for hs, tb in zip(half_scales, tanh_biases):     # small static unroll
        q = q + hs * jnp.tanh(z - tb)

    o_ref[...] = q.astype(o_ref.dtype)


# ------------------------------- wrapper ------------------------------------ #

def _pick_row_band(OH, Wp):
    """Output rows per grid step. Prefer a divisor of OH whose flattened lane
    width rows*Wp is a multiple of 128 (unmasked, lane-dense stores); otherwise
    fall back to the full height (block == full array dims is always legal)."""
    for rows in range(OH, 0, -1):
        if OH % rows == 0 and (rows * Wp) % 128 == 0 and rows * Wp <= 4096:
            return rows
    return OH


def cont_conv2d_forward(x_nchw, params, *, stride, padding, ac_T=1.0,
                        compute_dtype=jnp.float32):
    """Forward pass of ContConv2d (Linear=False, QA_flag=True, groups=1)."""
    conv_w = params["conv_w"]                       # (Cout, Cin, KH, KW)
    conv_b = params["conv_b"]                       # (Cout,)
    Cout, Cin, KH, KW = conv_w.shape
    N, Cin_x, H, W = x_nchw.shape
    assert Cin_x == Cin, "groups != 1 not implemented"

    OH = (H + 2 * padding - KH) // stride + 1
    OW = (W + 2 * padding - KW) // stride + 1
    Hp, Wp = H + 2 * padding, W + 2 * padding

    # Extra zero rows at the bottom so the shifted flat slices (which produce
    # KW-1 throw-away lanes per output row) never read past the array.
    needed_flat = stride * OH * Wp + (KH - 1) * Wp + KW - stride
    extra_rows = max(0, -(-(needed_flat - Hp * Wp) // Wp))

    x_p = jnp.pad(x_nchw.astype(compute_dtype),
                  ((0, 0), (0, 0),
                   (padding, padding + extra_rows), (padding, padding)))
    FLAT = (Hp + extra_rows) * Wp
    x_flat = x_p.reshape(N, Cin, FLAT)

    # Fold eval-mode BatchNorm (eps=1e-3, as in the module) and conv bias.
    bn_scale = params["bn_gamma"] / jnp.sqrt(params["bn_var"] + 1e-3)
    shift = (params["bn_beta"] + (conv_b - params["bn_mean"]) * bn_scale)
    shift = shift.reshape(Cout, 1).astype(jnp.float32)

    # (Cout, Cin, KH, KW) -> (KH*KW, Cout, Cin), (ki, kj) major, with the BN
    # scale pre-folded into the weights (saves a full-tile multiply in-kernel).
    w_k = jnp.transpose(conv_w, (2, 3, 0, 1)).reshape(KH * KW, Cout, Cin)
    w_k = (w_k * bn_scale.reshape(1, Cout, 1)).astype(compute_dtype)

    # Quantization constants, pre-folded for the tanh-form epilogue:
    #   alpha*dv_i*sigmoid(T*(beta*y - b_i))
    #     = 0.5*alpha*dv_i*tanh(0.5*T*beta*y - 0.5*T*b_i) + 0.5*alpha*dv_i
    qv = tuple(float(v) for v in params["ac_quan_values"])
    qb = tuple(float(b) for b in params["ac_quan_bias"])
    alpha = float(params["quan_alpha"])
    beta = float(params["quan_beta"])
    T = float(ac_T)
    half_scales = tuple(0.5 * alpha * (qv[i + 1] - qv[i])
                        for i in range(len(qv) - 1))
    tanh_biases = tuple(0.5 * T * b for b in qb)
    z_coef = 0.5 * T * beta
    q_const = alpha * qv[0] + sum(half_scales)

    rows = _pick_row_band(OH, Wp)
    num_bands = OH // rows
    L = rows * Wp

    kernel = functools.partial(
        _fused_cont_conv2d_kernel,
        KH=KH, KW=KW, Wp=Wp, stride=stride,
        rows_per_band=rows, num_bands=num_bands,
        z_coef=z_coef, tanh_biases=tanh_biases,
        half_scales=half_scales, q_const=q_const)

    out_flat = pl.pallas_call(
        kernel,
        out_shape=jax.ShapeDtypeStruct((N, Cout, OH * Wp), x_nchw.dtype),
        grid=(N, num_bands),
        in_specs=[
            # whole (flattened, padded) image stays resident across its bands
            pl.BlockSpec((None, Cin, FLAT), lambda n, b: (n, 0, 0)),
            pl.BlockSpec((KH * KW, Cout, Cin), lambda n, b: (0, 0, 0)),
            pl.BlockSpec((Cout, 1), lambda n, b: (0, 0)),
        ],
        out_specs=pl.BlockSpec((None, Cout, L), lambda n, b: (n, 0, b)),
        compiler_params=pltpu.CompilerParams(
            dimension_semantics=("parallel", "parallel"),
            vmem_limit_bytes=32 * 1024 * 1024),
    )(x_flat, w_k, shift)

    # (N, Cout, OH*Wp) -> NCHW (pure reshape, no transpose); drop the KW-1
    # (+ right-pad) throw-away columns of each row.
    return out_flat.reshape(N, Cout, OH, Wp)[:, :, :, :OW]


# --------------------------- pure-JAX reference ----------------------------- #

def cont_conv2d_reference(x, params, *, stride, padding, ac_T=1.0):
    y = jax.lax.conv_general_dilated(
        x, params["conv_w"], window_strides=(stride, stride),
        padding=[(padding, padding), (padding, padding)],
        dimension_numbers=("NCHW", "OIHW", "NCHW"))
    y = y + params["conv_b"][None, :, None, None]
    bn_scale = params["bn_gamma"] / jnp.sqrt(params["bn_var"] + 1e-3)
    y = (y - params["bn_mean"][None, :, None, None]) * bn_scale[None, :, None, None] \
        + params["bn_beta"][None, :, None, None]
    y = jnp.maximum(y, 0.0)
    qv = params["ac_quan_values"]
    z = params["quan_beta"] * y
    q = jnp.zeros_like(y)
    for i in range(len(qv) - 1):
        q = q + (qv[i + 1] - qv[i]) * jax.nn.sigmoid(
            ac_T * (z - params["ac_quan_bias"][i]))
    return params["quan_alpha"] * (q + qv[0])


# ---------------------------------- main ------------------------------------ #

if __name__ == "__main__":
    key = jax.random.PRNGKey(0)
    ks = jax.random.split(key, 8)

    N, Cin, H, W = 2, 4, 16, 16
    Cout, KH, stride, padding = 8, 3, 1, 1

    x = jax.random.normal(ks[0], (N, Cin, H, W), jnp.float32)

    params = {
        "conv_w": 0.1 * jax.random.normal(ks[1], (Cout, Cin, KH, KH), jnp.float32),
        "conv_b": 0.1 * jax.random.normal(ks[2], (Cout,), jnp.float32),
        "bn_gamma": 1.0 + 0.1 * jax.random.normal(ks[3], (Cout,), jnp.float32),
        "bn_beta": 0.1 * jax.random.normal(ks[4], (Cout,), jnp.float32),
        "bn_mean": 0.05 * jax.random.normal(ks[5], (Cout,), jnp.float32),
        "bn_var": jnp.abs(1.0 + 0.1 * jax.random.normal(ks[6], (Cout,), jnp.float32)),
        # Quantization-module parameters (ac_quan_values / ac_quan_bias[count] /
        # init_beta), deterministic in-script init.
        "ac_quan_values": (0.0, 1.0, 2.0, 4.0),
        "ac_quan_bias": (0.5, 1.5, 3.0),
        "quan_alpha": 1.0,
        "quan_beta": 1.0,   # init_beta
    }
    ac_T = 1.0              # self.ac_T = 1

    ref = cont_conv2d_reference(x, params, stride=stride, padding=padding, ac_T=ac_T)

    # f32 path (matches PyTorch-module numerics).
    out = cont_conv2d_forward(x, params, stride=stride, padding=padding, ac_T=ac_T)
    out = jax.block_until_ready(out)
    assert out.shape == (N, Cout, H, W), out.shape
    assert jnp.allclose(out, ref, atol=1e-4, rtol=1e-4), \
        float(jnp.max(jnp.abs(out - ref)))

    # bf16 MXU path (production option: halves the dominant input DMA bytes;
    # accumulation / epilogue stay f32) — looser tolerance vs f32 reference.
    out_bf16 = cont_conv2d_forward(x, params, stride=stride, padding=padding,
                                   ac_T=ac_T, compute_dtype=jnp.bfloat16)
    out_bf16 = jax.block_until_ready(out_bf16)
    assert jnp.allclose(out_bf16, ref, atol=1e-1, rtol=1e-1), \
        float(jnp.max(jnp.abs(out_bf16 - ref)))

    print("KERNEL_OK")
</pallas_src>

<mosaic_0001>
module attributes {stable_mosaic.version = 11 : i64} {
  func.func @_fused_cont_conv2d_kernel(%arg0: i32, %arg1: i32, %arg2: memref<1x4x342xf32, #tpu.memory_space<vmem>>, %arg3: memref<9x8x4xf32, #tpu.memory_space<vmem>>, %arg4: memref<8x1xf32, #tpu.memory_space<vmem>>, %arg5: memref<1x8x288xf32, #tpu.memory_space<vmem>>) attributes {dimension_semantics = [#tpu.dimension_semantics<parallel>, #tpu.dimension_semantics<parallel>], iteration_bounds = array<i64: 2, 1>, scalar_prefetch = 0 : i64, scratch_operands = 0 : i64, tpu.core_type = #tpu.core_type<tc>, window_params = [{transform_indices = @transform_0, window_bounds = array<i64: 1, 4, 342>}, {pipeline_mode = #tpu.pipeline_mode<synchronous>, transform_indices = @transform_1, window_bounds = array<i64: 9, 8, 4>}, {pipeline_mode = #tpu.pipeline_mode<synchronous>, transform_indices = @transform_2, window_bounds = array<i64: 8, 1>}, {transform_indices = @transform_3, window_bounds = array<i64: 1, 8, 288>}]} {
    %cst = arith.constant 0.000000e+00 : f32
    %0 = vector.broadcast %cst : f32 to vector<8x288xf32>
    %c0 = arith.constant 0 : index
    %c0_0 = arith.constant 0 : index
    %c0_1 = arith.constant 0 : index
    %1 = vector.load %arg2[%c0, %c0_0, %c0_1] : memref<1x4x342xf32, #tpu.memory_space<vmem>>, vector<1x4x288xf32>
    %2 = vector.shape_cast %1 : vector<1x4x288xf32> to vector<4x288xf32>
    %c0_2 = arith.constant 0 : index
    %c0_3 = arith.constant 0 : index
    %c0_4 = arith.constant 0 : index
    %3 = vector.load %arg3[%c0_2, %c0_3, %c0_4] : memref<9x8x4xf32, #tpu.memory_space<vmem>>, vector<1x8x4xf32>
    %4 = vector.shape_cast %3 : vector<1x8x4xf32> to vector<8x4xf32>
    %cst_5 = arith.constant dense<0.000000e+00> : vector<8x288xf32>
    %5 = tpu.matmul %4, %2, %cst_5 {dimension_numbers = #tpu.dot_dimension_numbers<[1], [0], [0], [1], [0, 0, 1, 1], [], []>} : vector<8x4xf32>, vector<4x288xf32>, vector<8x288xf32> -> vector<8x288xf32>
    %6 = arith.addf %0, %5 : vector<8x288xf32>
    %c0_6 = arith.constant 0 : index
    %c0_7 = arith.constant 0 : index
    %c1 = arith.constant 1 : index
    %7 = vector.load %arg2[%c0_6, %c0_7, %c1] : memref<1x4x342xf32, #tpu.memory_space<vmem>>, vector<1x4x288xf32>
    %8 = vector.shape_cast %7 : vector<1x4x288xf32> to vector<4x288xf32>
    %c1_8 = arith.constant 1 : index
    %c0_9 = arith.constant 0 : index
    %c0_10 = arith.constant 0 : index
    %9 = vector.load %arg3[%c1_8, %c0_9, %c0_10] : memref<9x8x4xf32, #tpu.memory_space<vmem>>, vector<1x8x4xf32>
    %10 = vector.shape_cast %9 : vector<1x8x4xf32> to vector<8x4xf32>
    %cst_11 = arith.constant dense<0.000000e+00> : vector<8x288xf32>
    %11 = tpu.matmul %10, %8, %cst_11 {dimension_numbers = #tpu.dot_dimension_numbers<[1], [0], [0], [1], [0, 0, 1, 1], [], []>} : vector<8x4xf32>, vector<4x288xf32>, vector<8x288xf32> -> vector<8x288xf32>
    %12 = arith.addf %6, %11 : vector<8x288xf32>
    %c0_12 = arith.constant 0 : index
    %c0_13 = arith.constant 0 : index
    %c2 = arith.constant 2 : index
    %13 = vector.load %arg2[%c0_12, %c0_13, %c2] : memref<1x4x342xf32, #tpu.memory_space<vmem>>, vector<1x4x288xf32>
    %14 = vector.shape_cast %13 : vector<1x4x288xf32> to vector<4x288xf32>
    %c2_14 = arith.constant 2 : index
    %c0_15 = arith.constant 0 : index
    %c0_16 = arith.constant 0 : index
    %15 = vector.load %arg3[%c2_14, %c0_15, %c0_16] : memref<9x8x4xf32, #tpu.memory_space<vmem>>, vector<1x8x4xf32>
    %16 = vector.shape_cast %15 : vector<1x8x4xf32> to vector<8x4xf32>
    %cst_17 = arith.constant dense<0.000000e+00> : vector<8x288xf32>
    %17 = tpu.matmul %16, %14, %cst_17 {dimension_numbers = #tpu.dot_dimension_numbers<[1], [0], [0], [1], [0, 0, 1, 1], [], []>} : vector<8x4xf32>, vector<4x288xf32>, vector<8x288xf32> -> vector<8x288xf32>
    %18 = arith.addf %12, %17 : vector<8x288xf32>
    %c0_18 = arith.constant 0 : index
    %c0_19 = arith.constant 0 : index
    %c18 = arith.constant 18 : index
    %19 = vector.load %arg2[%c0_18, %c0_19, %c18] : memref<1x4x342xf32, #tpu.memory_space<vmem>>, vector<1x4x288xf32>
    %20 = vector.shape_cast %19 : vector<1x4x288xf32> to vector<4x288xf32>
    %c3 = arith.constant 3 : index
    %c0_20 = arith.constant 0 : index
    %c0_21 = arith.constant 0 : index
    %21 = vector.load %arg3[%c3, %c0_20, %c0_21] : memref<9x8x4xf32, #tpu.memory_space<vmem>>, vector<1x8x4xf32>
    %22 = vector.shape_cast %21 : vector<1x8x4xf32> to vector<8x4xf32>
    %cst_22 = arith.constant dense<0.000000e+00> : vector<8x288xf32>
    %23 = tpu.matmul %22, %20, %cst_22 {dimension_numbers = #tpu.dot_dimension_numbers<[1], [0], [0], [1], [0, 0, 1, 1], [], []>} : vector<8x4xf32>, vector<4x288xf32>, vector<8x288xf32> -> vector<8x288xf32>
    %24 = arith.addf %18, %23 : vector<8x288xf32>
    %c0_23 = arith.constant 0 : index
    %c0_24 = arith.constant 0 : index
    %c19 = arith.constant 19 : index
    %25 = vector.load %arg2[%c0_23, %c0_24, %c19] : memref<1x4x342xf32, #tpu.memory_space<vmem>>, vector<1x4x288xf32>
    %26 = vector.shape_cast %25 : vector<1x4x288xf32> to vector<4x288xf32>
    %c4 = arith.constant 4 : index
    %c0_25 = arith.constant 0 : index
    %c0_26 = arith.constant 0 : index
    %27 = vector.load %arg3[%c4, %c0_25, %c0_26] : memref<9x8x4xf32, #tpu.memory_space<vmem>>, vector<1x8x4xf32>
    %28 = vector.shape_cast %27 : vector<1x8x4xf32> to vector<8x4xf32>
    %cst_27 = arith.constant dense<0.000000e+00> : vector<8x288xf32>
    %29 = tpu.matmul %28, %26, %cst_27 {dimension_numbers = #tpu.dot_dimension_numbers<[1], [0], [0], [1], [0, 0, 1, 1], [], []>} : vector<8x4xf32>, vector<4x288xf32>, vector<8x288xf32> -> vector<8x288xf32>
    %30 = arith.addf %24, %29 : vector<8x288xf32>
    %c0_28 = arith.constant 0 : index
    %c0_29 = arith.constant 0 : index
    %c20 = arith.constant 20 : index
    %31 = vector.load %arg2[%c0_28, %c0_29, %c20] : memref<1x4x342xf32, #tpu.memory_space<vmem>>, vector<1x4x288xf32>
    %32 = vector.shape_cast %31 : vector<1x4x288xf32> to vector<4x288xf32>
    %c5 = arith.constant 5 : index
    %c0_30 = arith.constant 0 : index
    %c0_31 = arith.constant 0 : index
    %33 = vector.load %arg3[%c5, %c0_30, %c0_31] : memref<9x8x4xf32, #tpu.memory_space<vmem>>, vector<1x8x4xf32>
    %34 = vector.shape_cast %33 : vector<1x8x4xf32> to vector<8x4xf32>
    %cst_32 = arith.constant dense<0.000000e+00> : vector<8x288xf32>
    %35 = tpu.matmul %34, %32, %cst_32 {dimension_numbers = #tpu.dot_dimension_numbers<[1], [0], [0], [1], [0, 0, 1, 1], [], []>} : vector<8x4xf32>, vector<4x288xf32>, vector<8x288xf32> -> vector<8x288xf32>
    %36 = arith.addf %30, %35 : vector<8x288xf32>
    %c0_33 = arith.constant 0 : index
    %c0_34 = arith.constant 0 : index
    %c36 = arith.constant 36 : index
    %37 = vector.load %arg2[%c0_33, %c0_34, %c36] : memref<1x4x342xf32, #tpu.memory_space<vmem>>, vector<1x4x288xf32>
    %38 = vector.shape_cast %37 : vector<1x4x288xf32> to vector<4x288xf32>
    %c6 = arith.constant 6 : index
    %c0_35 = arith.constant 0 : index
    %c0_36 = arith.constant 0 : index
    %39 = vector.load %arg3[%c6, %c0_35, %c0_36] : memref<9x8x4xf32, #tpu.memory_space<vmem>>, vector<1x8x4xf32>
    %40 = vector.shape_cast %39 : vector<1x8x4xf32> to vector<8x4xf32>
    %cst_37 = arith.constant dense<0.000000e+00> : vector<8x288xf32>
    %41 = tpu.matmul %40, %38, %cst_37 {dimension_numbers = #tpu.dot_dimension_numbers<[1], [0], [0], [1], [0, 0, 1, 1], [], []>} : vector<8x4xf32>, vector<4x288xf32>, vector<8x288xf32> -> vector<8x288xf32>
    %42 = arith.addf %36, %41 : vector<8x288xf32>
    %c0_38 = arith.constant 0 : index
    %c0_39 = arith.constant 0 : index
    %c37 = arith.constant 37 : index
    %43 = vector.load %arg2[%c0_38, %c0_39, %c37] : memref<1x4x342xf32, #tpu.memory_space<vmem>>, vector<1x4x288xf32>
    %44 = vector.shape_cast %43 : vector<1x4x288xf32> to vector<4x288xf32>
    %c7 = arith.constant 7 : index
    %c0_40 = arith.constant 0 : index
    %c0_41 = arith.constant 0 : index
    %45 = vector.load %arg3[%c7, %c0_40, %c0_41] : memref<9x8x4xf32, #tpu.memory_space<vmem>>, vector<1x8x4xf32>
    %46 = vector.shape_cast %45 : vector<1x8x4xf32> to vector<8x4xf32>
    %cst_42 = arith.constant dense<0.000000e+00> : vector<8x288xf32>
    %47 = tpu.matmul %46, %44, %cst_42 {dimension_numbers = #tpu.dot_dimension_numbers<[1], [0], [0], [1], [0, 0, 1, 1], [], []>} : vector<8x4xf32>, vector<4x288xf32>, vector<8x288xf32> -> vector<8x288xf32>
    %48 = arith.addf %42, %47 : vector<8x288xf32>
    %c0_43 = arith.constant 0 : index
    %c0_44 = arith.constant 0 : index
    %c38 = arith.constant 38 : index
    %49 = vector.load %arg2[%c0_43, %c0_44, %c38] : memref<1x4x342xf32, #tpu.memory_space<vmem>>, vector<1x4x288xf32>
    %50 = vector.shape_cast %49 : vector<1x4x288xf32> to vector<4x288xf32>
    %c8 = arith.constant 8 : index
    %c0_45 = arith.constant 0 : index
    %c0_46 = arith.constant 0 : index
    %51 = vector.load %arg3[%c8, %c0_45, %c0_46] : memref<9x8x4xf32, #tpu.memory_space<vmem>>, vector<1x8x4xf32>
    %52 = vector.shape_cast %51 : vector<1x8x4xf32> to vector<8x4xf32>
    %cst_47 = arith.constant dense<0.000000e+00> : vector<8x288xf32>
    %53 = tpu.matmul %52, %50, %cst_47 {dimension_numbers = #tpu.dot_dimension_numbers<[1], [0], [0], [1], [0, 0, 1, 1], [], []>} : vector<8x4xf32>, vector<4x288xf32>, vector<8x288xf32> -> vector<8x288xf32>
    %54 = arith.addf %48, %53 : vector<8x288xf32>
    %c0_48 = arith.constant 0 : index
    %c0_49 = arith.constant 0 : index
    %55 = vector.load %arg4[%c0_48, %c0_49] : memref<8x1xf32, #tpu.memory_space<vmem>>, vector<8x1xf32>
    %56 = vector.broadcast %55 : vector<8x1xf32> to vector<8x288xf32>
    %57 = arith.addf %54, %56 : vector<8x288xf32>
    %cst_50 = arith.constant 0.000000e+00 : f32
    %58 = vector.broadcast %cst_50 : f32 to vector<8x288xf32>
    %59 = arith.maximumf %57, %58 : vector<8x288xf32>
    %cst_51 = arith.constant 5.000000e-01 : f32
    %60 = vector.broadcast %cst_51 : f32 to vector<8x288xf32>
    %61 = arith.mulf %60, %59 : vector<8x288xf32>
    %cst_52 = arith.constant 2.500000e-01 : f32
    %62 = vector.broadcast %cst_52 : f32 to vector<8x288xf32>
    %63 = arith.subf %61, %62 : vector<8x288xf32>
    %64 = math.tanh %63 : vector<8x288xf32>
    %cst_53 = arith.constant 5.000000e-01 : f32
    %65 = vector.broadcast %cst_53 : f32 to vector<8x288xf32>
    %66 = arith.mulf %65, %64 : vector<8x288xf32>
    %cst_54 = arith.constant 2.000000e+00 : f32
    %67 = vector.broadcast %cst_54 : f32 to vector<8x288xf32>
    %68 = arith.addf %67, %66 : vector<8x288xf32>
    %cst_55 = arith.constant 7.500000e-01 : f32
    %69 = vector.broadcast %cst_55 : f32 to vector<8x288xf32>
    %70 = arith.subf %61, %69 : vector<8x288xf32>
    %71 = math.tanh %70 : vector<8x288xf32>
    %cst_56 = arith.constant 5.000000e-01 : f32
    %72 = vector.broadcast %cst_56 : f32 to vector<8x288xf32>
    %73 = arith.mulf %72, %71 : vector<8x288xf32>
    %74 = arith.addf %68, %73 : vector<8x288xf32>
    %cst_57 = arith.constant 1.500000e+00 : f32
    %75 = vector.broadcast %cst_57 : f32 to vector<8x288xf32>
    %76 = arith.subf %61, %75 : vector<8x288xf32>
    %77 = math.tanh %76 : vector<8x288xf32>
    %cst_58 = arith.constant 1.000000e+00 : f32
    %78 = vector.broadcast %cst_58 : f32 to vector<8x288xf32>
    %79 = arith.mulf %78, %77 : vector<8x288xf32>
    %80 = arith.addf %74, %79 : vector<8x288xf32>
    %c0_59 = arith.constant 0 : index
    %c0_60 = arith.constant 0 : index
    %c0_61 = arith.constant 0 : index
    %81 = vector.load %arg5[%c0_59, %c0_60, %c0_61] : memref<1x8x288xf32, #tpu.memory_space<vmem>>, vector<1x8x288xf32>
    %82 = vector.shape_cast %81 : vector<1x8x288xf32> to vector<8x288xf32>
    %83 = vector.shape_cast %80 : vector<8x288xf32> to vector<1x8x288xf32>
    tpu.vector_store %arg5[%c0_59, %c0_60, %c0_61], %83 {strides = array<i32>} : memref<1x8x288xf32, #tpu.memory_space<vmem>>, vector<1x8x288xf32>,
    return
  }
  func.func @transform_0(%arg0: i32, %arg1: i32) -> (i32, i32, i32) {
    %c0_i32 = arith.constant 0 : i32
    %c0_i32_0 = arith.constant 0 : i32
    %c0_i32_1 = arith.constant 0 : i32
    return %arg0, %c0_i32, %c0_i32_0 : i32, i32, i32
  }
  func.func @transform_1(%arg0: i32, %arg1: i32) -> (i32, i32, i32) {
    %c0_i32 = arith.constant 0 : i32
    %c0_i32_0 = arith.constant 0 : i32
    %c0_i32_1 = arith.constant 0 : i32
    %c0_i32_2 = arith.constant 0 : i32
    return %c0_i32, %c0_i32_0, %c0_i32_1 : i32, i32, i32
  }
  func.func @transform_2(%arg0: i32, %arg1: i32) -> (i32, i32) {
    %c0_i32 = arith.constant 0 : i32
    %c0_i32_0 = arith.constant 0 : i32
    %c0_i32_1 = arith.constant 0 : i32
    return %c0_i32, %c0_i32_0 : i32, i32
  }
  func.func @transform_3(%arg0: i32, %arg1: i32) -> (i32, i32, i32) {
    %c0_i32 = arith.constant 0 : i32
    %c0_i32_0 = arith.constant 0 : i32
    return %arg0, %c0_i32, %arg1 : i32, i32, i32
  }
}

</mosaic_0001>

<llo_original>
// kernel: tpu_custom_call.1
$region0: #{tpu_custom_call.1}
  #allocation0 [shape = 'u32[]', space=smem, size = 0x4, offset = 0x4, fixed_abs, tag = 'smem constant byte address 0x4 - core index']
  #allocation1 [shape = 'u32[72,128]{1,0:T(1,128)}', space=vmem, size = 0x9000, scoped, tag = 'internal scratch']
  %s0 = inlined_call_operand.vmem [shape: f32[2,4,342], index: 0, kind: input, shape index: {}]
  %s1 = inlined_call_operand.vmem [shape: f32[9,8,4], index: 1, kind: input, shape index: {}]
  %s2 = inlined_call_operand.vmem [shape: f32[8,1], index: 2, kind: input, shape index: {}]
  %s3 = inlined_call_operand.hbm [shape: f32[2,8,288], index: 3, kind: output, shape index: {}]
  %s4 = sld [smem:[#allocation0]]
  $region45: #{tpu_custom_call.1} parent=0
    _
  %s6 = ssub.s32 1, %s4
  %s7 = scalar_select 0, %s6, %s4
  $region1: #{tpu_custom_call.1} parent=0
    #allocation2 [shape = 'u8[24576]{0}', space=vmem, size = 0x6000, scoped, tag = 'output window, operand 0']
    #allocation3 [shape = 's32[2]{0}', space=sflag, size = 0x8, scoped, tag = 'scoped memory for tpu_custom_call.1']
    %8 = vsyncpa [#allocation3], 0
    %s9 = scalar_lea.sflag [#allocation3], 1
    %10 = vsyncpa %s9, 0
    loop: start=0, step=1, limit=4
    $region2: #{tpu_custom_call.1} parent=1 // loop_pre_header
      _
    $region3: #{tpu_custom_call.1} parent=1 // loop_header
      %s12 = sphi 0, %s16
      %p13 = scmp.ge.s32.totalorder %s12, 4
      %s19 = sphi 0, %s31
      %s20 = sphi 0, %s27
      %s21 = sphi 0, %s19
      %s22 = sphi 0, %s20
      %s23 = sphi 0, %s21
      %s24 = sphi 0, %s22
      %s34 = sphi 0, %s36
      %s37 = sphi 0, %s34
      %s38 = sphi 0, %s37
      %s54 = sphi 0, %s38
      %s58 = sphi 0, %s58
      %s60 = sphi 0, %s58
      %s61 = sphi 0, %s60
      %s75 = sphi 0, %s61
      %s79 = sphi 0, %s79
      %s81 = sphi 0, %s79
      %s82 = sphi 0, %s81
      %s96 = sphi 0, %s82
      %s104 = sphi 0, %s106
      %s107 = sphi 0, %s104
      %s108 = sphi 0, %s107
      %s124 = sphi 0, %s108
    $region4: #{tpu_custom_call.1} parent=1 // loop_header_branch
      %15 = sbr.rel (%p13) target = $region8
    $region5: #{tpu_custom_call.1} parent=1 // loop_body
      %s17 = ssub.s32 %s12, 1
      %s18 = ssub.s32 %s12, 2
      %s25 = sadd.s32 1, %s20
      %p26 = scmp.ge.s32.totalorder %s25, 1
      %s27 = scalar_select %p26, 0, %s25
      %s28 = sadd.s32 1, %s19
      %s29 = scalar_select %p26, %s28, %s19
      %p30 = scmp.ge.s32.totalorder %s29, 2
      %s31 = scalar_select %p30, 0, %s29
      %s32 = ssub.s32 %s19, %s31
      %p33 = scmp.eq.s32.totalorder %s32, 0
      %s35 = sadd.s32 %s34, 1
      %s36 = scalar_select %p33, %s34, %s35
      %p39 = pneg %p33
      %p40 = scmp.eq.s32.totalorder %s12, 1
      %p41 = por %p39, %p40
      %p42 = scmp.ne.s32.totalorder %s34, %s37
      %p43 = scmp.eq.s32.totalorder %s12, 0
      %p44 = por %p42, %p43
      %p45 = scmp.ne.s32.totalorder %s34, %s37
      %p46 = scmp.eq.s32.totalorder %s17, 1
      %p47 = por %p45, %p46
      %p48 = scmp.ne.s32.totalorder %s37, %s38
      %p49 = scmp.eq.s32.totalorder %s17, 0
      %p50 = por %p48, %p49
      %p51 = scmp.ne.s32.totalorder %s37, %s38
      %p52 = scmp.eq.s32.totalorder %s18, 1
      %p53 = por %p51, %p52
      %p55 = scmp.ne.s32.totalorder %s38, %s54
      %p56 = scmp.eq.s32.totalorder %s18, 0
      %p57 = por %p55, %p56
      %s59 = sadd.s32 %s58, 1
      %p62 = scmp.eq.s32.totalorder %s12, 1
      %p63 = scmp.ne.s32.totalorder %s58, %s60
      %p64 = scmp.eq.s32.totalorder %s12, 0
      %p65 = por %p63, %p64
      %p66 = scmp.ne.s32.totalorder %s58, %s60
      %p67 = scmp.eq.s32.totalorder %s17, 1
      %p68 = por %p66, %p67
      %p69 = scmp.ne.s32.totalorder %s60, %s61
      %p70 = scmp.eq.s32.totalorder %s17, 0
      %p71 = por %p69, %p70
      %p72 = scmp.ne.s32.totalorder %s60, %s61
      %p73 = scmp.eq.s32.totalorder %s18, 1
      %p74 = por %p72, %p73
      %p76 = scmp.ne.s32.totalorder %s61, %s75
      %p77 = scmp.eq.s32.totalorder %s18, 0
      %p78 = por %p76, %p77
      %s80 = sadd.s32 %s79, 1
      %p83 = scmp.eq.s32.totalorder %s12, 1
      %p84 = scmp.ne.s32.totalorder %s79, %s81
      %p85 = scmp.eq.s32.totalorder %s12, 0
      %p86 = por %p84, %p85
      %p87 = scmp.ne.s32.totalorder %s79, %s81
      %p88 = scmp.eq.s32.totalorder %s17, 1
      %p89 = por %p87, %p88
      %p90 = scmp.ne.s32.totalorder %s81, %s82
      %p91 = scmp.eq.s32.totalorder %s17, 0
      %p92 = por %p90, %p91
      %p93 = scmp.ne.s32.totalorder %s81, %s82
      %p94 = scmp.eq.s32.totalorder %s18, 1
      %p95 = por %p93, %p94
      %p97 = scmp.ne.s32.totalorder %s82, %s96
      %p98 = scmp.eq.s32.totalorder %s18, 0
      %p99 = por %p97, %p98
      %s100 = ssub.s32 %s19, %s31
      %s101 = ssub.s32 %s20, %s27
      %s102 = sor.u32 %s100, %s101
      %p103 = scmp.eq.s32.totalorder %s102, 0
      %s105 = sadd.s32 %s104, 1
      %s106 = scalar_select %p103, %s104, %s105
      %p109 = pneg %p103
      %p110 = scmp.eq.s32.totalorder %s12, 1
      %p111 = por %p109, %p110
      %p112 = scmp.ne.s32.totalorder %s104, %s107
      %p113 = scmp.eq.s32.totalorder %s12, 0
      %p114 = por %p112, %p113
      %p115 = scmp.ne.s32.totalorder %s104, %s107
      %p116 = scmp.eq.s32.totalorder %s17, 1
      %p117 = por %p115, %p116
      %p118 = scmp.ne.s32.totalorder %s107, %s108
      %p119 = scmp.eq.s32.totalorder %s17, 0
      %p120 = por %p118, %p119
      %p121 = scmp.ne.s32.totalorder %s107, %s108
      %p122 = scmp.eq.s32.totalorder %s18, 1
      %p123 = por %p121, %p122
      %p125 = scmp.ne.s32.totalorder %s108, %s124
      %p126 = scmp.eq.s32.totalorder %s18, 0
      %p127 = por %p125, %p126
      %p128 = scmp.le.s32.totalorder 1, %s12
      %p129 = scmp.lt.s32.totalorder %s12, 3
      %p130 = pnand %p128, %p129
      %p131 = pneg %p130
      // Predicated region
      $region9: #{tpu_custom_call.1} parent=5 // pred_check
        _
      $region10: #{tpu_custom_call.1} parent=5 // pred_check_branch
        %133 = sbr.rel (%p130) target = $region12
      $region11: #{tpu_custom_call.1} parent=5 // pred_region
        %s134 = ssub.s32 %s12, 1
        // Predicated region
        $region13: #{tpu_custom_call.1} parent=11 // pred_check
          %p135 = pneg %p71
        $region14: #{tpu_custom_call.1} parent=11 // pred_check_branch
          %137 = sbr.rel (%p135) target = $region16
        $region15: #{tpu_custom_call.1} parent=11 // pred_region
          _
        $region16: #{tpu_custom_call.1} parent=11 // pred_fallthru
          _
        // Predicated region
        $region17: #{tpu_custom_call.1} parent=11 // pred_check
          %p138 = pneg %p92
        $region18: #{tpu_custom_call.1} parent=11 // pred_check_branch
          %140 = sbr.rel (%p138) target = $region20
        $region19: #{tpu_custom_call.1} parent=11 // pred_region
          _
        $region20: #{tpu_custom_call.1} parent=11 // pred_fallthru
          _
      $region12: #{tpu_custom_call.1} parent=5 // pred_fallthru
        _
      %p141 = scmp.lt.s32.totalorder %s12, 2
      // Predicated region
      $region21: #{tpu_custom_call.1} parent=5 // pred_check
        %p142 = pneg %p141
      $region22: #{tpu_custom_call.1} parent=5 // pred_check_branch
        %144 = sbr.rel (%p142) target = $region24
      $region23: #{tpu_custom_call.1} parent=5 // pred_region
        // Predicated region
        $region25: #{tpu_custom_call.1} parent=23 // pred_check
          %p145 = pneg %p44
        $region26: #{tpu_custom_call.1} parent=23 // pred_check_branch
          %147 = sbr.rel (%p145) target = $region28
        $region27: #{tpu_custom_call.1} parent=23 // pred_region
          %p148 = scmp.lt.s32.totalorder %s19, 1
          %s149 = scalar_select %p148, %s19, 1
          %s150 = smul.addr %s149, 3
          %s151 = smul.addr %s150, 4
          %s152 = scalar_lea.vmem %s0, %s151
        $region28: #{tpu_custom_call.1} parent=23 // pred_fallthru
          _
      $region24: #{tpu_custom_call.1} parent=5 // pred_fallthru
        _
      %p153 = scmp.le.s32.totalorder 1, %s12
      %p154 = scmp.lt.s32.totalorder %s12, 3
      %p155 = pnand %p153, %p154
      %p156 = pneg %p155
      // Predicated region
      $region29: #{tpu_custom_call.1} parent=5 // pred_check
        _
      $region30: #{tpu_custom_call.1} parent=5 // pred_check_branch
        %158 = sbr.rel (%p155) target = $region32
      $region31: #{tpu_custom_call.1} parent=5 // pred_region
        %s159 = ssub.s32 %s12, 1
        %p160 = scmp.lt.s32.totalorder %s21, 1
        %s161 = scalar_select %p160, %s21, 1
        %s162 = smul.addr %s161, 3
        %s163 = smul.addr %s162, 4
        %s164 = scalar_lea.vmem %s0, %s163
        %p165 = pneg %p50
        %p166 = pneg %p47
        %p167 = pneg %p71
        %p168 = pneg %p68
        %p169 = pneg %p92
        %p170 = pneg %p89
        %p171 = pneg %p120
        %p172 = pneg %p117
        %s173 = sand.u32 %s107, 1
        %s174 = scalar_lea.sflag [#allocation3], %s173
        %s175 = sand.u32 %s107, 1
        %s176 = smul.addr %s175, 24
        %s177 = scalar_lea.vmem [#allocation2], %s176
        %p178 = scmp.lt.s32.totalorder %s21, 1
        %s179 = scalar_select %p178, %s21, 1
        %s180 = smul.addr %s179, 3
        %s181 = smul.addr %s180, 4
        %s182 = scalar_lea.vmem %s0, %s181
        %s183 = smul.u32 3, %s22
        %v184 = vld [vmem:[%s182] sm:$0xff]
        %v185 = vld [vmem:[%s182 + $0x8] sm:$0xf]
        %v186 = vld [vmem:[%s1] sm:$0xff]
        %s187 = scalar_lea.vmem %s1, 8
        %v188 = vld [vmem:[%s187] sm:$0xff]
        %191 = vst [vmem:[#allocation1] ss:$2 sm:$0xff] %v184
        %s192 = scalar_lea.vmem [#allocation1], 16
        %193 = vst [vmem:[%s192] ss:$2 sm:$0xff] %v185
        %v194 = vld.sshfl [vmem:[#allocation1] sm:$0xff pattern:$0x75316420]
        %v195 = vld.sshfl [vmem:[#allocation1 + $0x8] sm:$0xff pattern:$0x75316420]
        %v196 = vld.sshfl [vmem:[#allocation1 + $0x10] sm:$0xff pattern:$0x75316420]
        %197 = vrot.lane.b32.xlu0 %v194, 127
        %v198 = vpop.permute.xlu0 %197
        %199 = vrot.lane.b32.xlu0 %v195, 127
        %v200 = vpop.permute.xlu0 %199
        %201 = vrot.lane.b32.xlu0 %v196, 127
        %v202 = vpop.permute.xlu0 %201
        %vm203 = vcmask 1039360
        %v204 = vsel %vm203, %v198, %v200
        %v205 = vsel %vm203, %v200, %v202
        %vm206 = vcmask 31744
        %v208 = vsel %vm206, %v188, 0
        %vm210 = vcmask 1043456
        %v211 = vsel %vm210, %v204, 0
        %v213 = vsel %vm210, %v205, 0
        %v215 = vsel %vm210, %v202, 0
        %217 = vmatpush.msra.mxu0 0.0
        %218 = vmatpush.msra.mxu0 0.0
        %219 = vmatpush.msra.mxu0 0.0
        %220 = vmatpush.msra.mxu0 0.0
        %221 = vmatpush.msra.mxu0 0.0
        %222 = vmatpush.msra.mxu0 0.0
        %223 = vmatpush.msra.mxu0 0.0
        %224 = vmatpush.msra.mxu0 0.0
        %225 = vmatpush.msra.mxu0 0.0
        %226 = vmatpush.msra.mxu0 0.0
        %227 = vmatpush.msra.mxu0 0.0
        %228 = vmatpush.msra.mxu0 0.0
        %229 = vmatpush.msra.mxu0 0.0
        %230 = vmatpush.msra.mxu0 0.0
        %231 = vmatpush.msra.mxu0 0.0
        %232 = vmatpush.msra.mxu0 %v211
        %233 = vmatmul.f32.gmra.mxu0 %v208
        %v234 = vpop.f32.mrf.mxu0
        %v235 = vadd.f32 0.0, %v234
        %236 = vdwg.mxu0
        %237 = vmatpush.msra.mxu0 0.0
        %238 = vmatpush.msra.mxu0 0.0
        %239 = vmatpush.msra.mxu0 0.0
        %240 = vmatpush.msra.mxu0 0.0
        %241 = vmatpush.msra.mxu0 0.0
        %242 = vmatpush.msra.mxu0 0.0
        %243 = vmatpush.msra.mxu0 0.0
        %244 = vmatpush.msra.mxu0 0.0
        %245 = vmatpush.msra.mxu0 0.0
        %246 = vmatpush.msra.mxu0 0.0
        %247 = vmatpush.msra.mxu0 0.0
        %248 = vmatpush.msra.mxu0 0.0
        %249 = vmatpush.msra.mxu0 0.0
        %250 = vmatpush.msra.mxu0 0.0
        %251 = vmatpush.msra.mxu0 0.0
        %252 = vmatpush.msra.mxu0 %v213
        %253 = vmatmul.f32.gmra.mxu0 %v208
        %v254 = vpop.f32.mrf.mxu0
        %v255 = vadd.f32 0.0, %v254
        %256 = vdwg.mxu0
        %257 = vmatpush.msra.mxu0 0.0
        %258 = vmatpush.msra.mxu0 0.0
        %259 = vmatpush.msra.mxu0 0.0
        %260 = vmatpush.msra.mxu0 0.0
        %261 = vmatpush.msra.mxu0 0.0
        %262 = vmatpush.msra.mxu0 0.0
        %263 = vmatpush.msra.mxu0 0.0
        %264 = vmatpush.msra.mxu0 0.0
        %265 = vmatpush.msra.mxu0 0.0
        %266 = vmatpush.msra.mxu0 0.0
        %267 = vmatpush.msra.mxu0 0.0
        %268 = vmatpush.msra.mxu0 0.0
        %269 = vmatpush.msra.mxu0 0.0
        %270 = vmatpush.msra.mxu0 0.0
        %271 = vmatpush.msra.mxu0 0.0
        %272 = vmatpush.msra.mxu0 %v215
        %273 = vmatmul.f32.gmra.mxu0 %v208
        %v274 = vpop.f32.mrf.mxu0
        %v275 = vadd.f32 0.0, %v274
        %276 = vdwg.mxu0
        %277 = vst [vmem:[#allocation1] ss:$2 sm:$0xff] %v184
        %s278 = scalar_lea.vmem [#allocation1], 16
        %279 = vst [vmem:[%s278] ss:$2 sm:$0xff] %v185
        %v280 = vld.sshfl [vmem:[#allocation1] sm:$0xff pattern:$0x75316420]
        %v281 = vld.sshfl [vmem:[#allocation1 + $0x8] sm:$0xff pattern:$0x75316420]
        %v282 = vld.sshfl [vmem:[#allocation1 + $0x10] sm:$0xff pattern:$0x75316420]
        %v284 = vsel %vm206, %v186, 0
        %v286 = vsel %vm210, %v280, 0
        %v288 = vsel %vm210, %v281, 0
        %v290 = vsel %vm210, %v282, 0
        %292 = vmatpush.msra.mxu0 0.0
        %293 = vmatpush.msra.mxu0 0.0
        %294 = vmatpush.msra.mxu0 0.0
        %295 = vmatpush.msra.mxu0 0.0
        %296 = vmatpush.msra.mxu0 0.0
        %297 = vmatpush.msra.mxu0 0.0
        %298 = vmatpush.msra.mxu0 0.0
        %299 = vmatpush.msra.mxu0 0.0
        %300 = vmatpush.msra.mxu0 0.0
        %301 = vmatpush.msra.mxu0 0.0
        %302 = vmatpush.msra.mxu0 0.0
        %303 = vmatpush.msra.mxu0 0.0
        %304 = vmatpush.msra.mxu0 0.0
        %305 = vmatpush.msra.mxu0 0.0
        %306 = vmatpush.msra.mxu0 0.0
        %307 = vmatpush.msra.mxu0 %v286
        %308 = vmatmul.f32.gmra.mxu0 %v284
        %v309 = vpop.f32.mrf.mxu0
        %v310 = vadd.f32 %v235, %v309
        %311 = vdwg.mxu0
        %312 = vmatpush.msra.mxu0 0.0
        %313 = vmatpush.msra.mxu0 0.0
        %314 = vmatpush.msra.mxu0 0.0
        %315 = vmatpush.msra.mxu0 0.0
        %316 = vmatpush.msra.mxu0 0.0
        %317 = vmatpush.msra.mxu0 0.0
        %318 = vmatpush.msra.mxu0 0.0
        %319 = vmatpush.msra.mxu0 0.0
        %320 = vmatpush.msra.mxu0 0.0
        %321 = vmatpush.msra.mxu0 0.0
        %322 = vmatpush.msra.mxu0 0.0
        %323 = vmatpush.msra.mxu0 0.0
        %324 = vmatpush.msra.mxu0 0.0
        %325 = vmatpush.msra.mxu0 0.0
        %326 = vmatpush.msra.mxu0 0.0
        %327 = vmatpush.msra.mxu0 %v288
        %328 = vmatmul.f32.gmra.mxu0 %v284
        %v329 = vpop.f32.mrf.mxu0
        %v330 = vadd.f32 %v255, %v329
        %331 = vdwg.mxu0
        %332 = vmatpush.msra.mxu0 0.0
        %333 = vmatpush.msra.mxu0 0.0
        %334 = vmatpush.msra.mxu0 0.0
        %335 = vmatpush.msra.mxu0 0.0
        %336 = vmatpush.msra.mxu0 0.0
        %337 = vmatpush.msra.mxu0 0.0
        %338 = vmatpush.msra.mxu0 0.0
        %339 = vmatpush.msra.mxu0 0.0
        %340 = vmatpush.msra.mxu0 0.0
        %341 = vmatpush.msra.mxu0 0.0
        %342 = vmatpush.msra.mxu0 0.0
        %343 = vmatpush.msra.mxu0 0.0
        %344 = vmatpush.msra.mxu0 0.0
        %345 = vmatpush.msra.mxu0 0.0
        %346 = vmatpush.msra.mxu0 0.0
        %347 = vmatpush.msra.mxu0 %v290
        %348 = vmatmul.f32.gmra.mxu0 %v284
        %v349 = vpop.f32.mrf.mxu0
        %v350 = vadd.f32 %v275, %v349
        %351 = vdwg.mxu0
        %v352 = vld [vmem:[%s182] sm:$0xff]
        %v353 = vld [vmem:[%s182 + $0x8] sm:$0xf]
        %s354 = scalar_lea.vmem %s1, 16
        %v355 = vld [vmem:[%s354] sm:$0xff]
        %358 = vst [vmem:[#allocation1] ss:$2 sm:$0xff] %v352
        %s359 = scalar_lea.vmem [#allocation1], 16
        %360 = vst [vmem:[%s359] ss:$2 sm:$0xff] %v353
        %v361 = vld.sshfl [vmem:[#allocation1] sm:$0xff pattern:$0x75316420]
        %v362 = vld.sshfl [vmem:[#allocation1 + $0x8] sm:$0xff pattern:$0x75316420]
        %v363 = vld.sshfl [vmem:[#allocation1 + $0x10] sm:$0xff pattern:$0x75316420]
        %364 = vrot.lane.b32.xlu0 %v361, 126
        %v365 = vpop.permute.xlu0 %364
        %366 = vrot.lane.b32.xlu0 %v362, 126
        %v367 = vpop.permute.xlu0 %366
        %368 = vrot.lane.b32.xlu0 %v363, 126
        %v369 = vpop.permute.xlu0 %368
        %vm370 = vcmask 1031168
        %v371 = vsel %vm370, %v365, %v367
        %v372 = vsel %vm370, %v367, %v369
        %v374 = vsel %vm206, %v355, 0
        %v376 = vsel %vm210, %v371, 0
        %v378 = vsel %vm210, %v372, 0
        %v380 = vsel %vm210, %v369, 0
        %382 = vmatpush.msra.mxu0 0.0
        %383 = vmatpush.msra.mxu0 0.0
        %384 = vmatpush.msra.mxu0 0.0
        %385 = vmatpush.msra.mxu0 0.0
        %386 = vmatpush.msra.mxu0 0.0
        %387 = vmatpush.msra.mxu0 0.0
        %388 = vmatpush.msra.mxu0 0.0
        %389 = vmatpush.msra.mxu0 0.0
        %390 = vmatpush.msra.mxu0 0.0
        %391 = vmatpush.msra.mxu0 0.0
        %392 = vmatpush.msra.mxu0 0.0
        %393 = vmatpush.msra.mxu0 0.0
        %394 = vmatpush.msra.mxu0 0.0
        %395 = vmatpush.msra.mxu0 0.0
        %396 = vmatpush.msra.mxu0 0.0
        %397 = vmatpush.msra.mxu0 %v376
        %398 = vmatmul.f32.gmra.mxu0 %v374
        %v399 = vpop.f32.mrf.mxu0
        %v400 = vadd.f32 0.0, %v399
        %401 = vdwg.mxu0
        %402 = vmatpush.msra.mxu0 0.0
        %403 = vmatpush.msra.mxu0 0.0
        %404 = vmatpush.msra.mxu0 0.0
        %405 = vmatpush.msra.mxu0 0.0
        %406 = vmatpush.msra.mxu0 0.0
        %407 = vmatpush.msra.mxu0 0.0
        %408 = vmatpush.msra.mxu0 0.0
        %409 = vmatpush.msra.mxu0 0.0
        %410 = vmatpush.msra.mxu0 0.0
        %411 = vmatpush.msra.mxu0 0.0
        %412 = vmatpush.msra.mxu0 0.0
        %413 = vmatpush.msra.mxu0 0.0
        %414 = vmatpush.msra.mxu0 0.0
        %415 = vmatpush.msra.mxu0 0.0
        %416 = vmatpush.msra.mxu0 0.0
        %417 = vmatpush.msra.mxu0 %v378
        %418 = vmatmul.f32.gmra.mxu0 %v374
        %v419 = vpop.f32.mrf.mxu0
        %v420 = vadd.f32 0.0, %v419
        %421 = vdwg.mxu0
        %422 = vmatpush.msra.mxu0 0.0
        %423 = vmatpush.msra.mxu0 0.0
        %424 = vmatpush.msra.mxu0 0.0
        %425 = vmatpush.msra.mxu0 0.0
        %426 = vmatpush.msra.mxu0 0.0
        %427 = vmatpush.msra.mxu0 0.0
        %428 = vmatpush.msra.mxu0 0.0
        %429 = vmatpush.msra.mxu0 0.0
        %430 = vmatpush.msra.mxu0 0.0
        %431 = vmatpush.msra.mxu0 0.0
        %432 = vmatpush.msra.mxu0 0.0
        %433 = vmatpush.msra.mxu0 0.0
        %434 = vmatpush.msra.mxu0 0.0
        %435 = vmatpush.msra.mxu0 0.0
        %436 = vmatpush.msra.mxu0 0.0
        %437 = vmatpush.msra.mxu0 %v380
        %438 = vmatmul.f32.gmra.mxu0 %v374
        %v439 = vpop.f32.mrf.mxu0
        %v440 = vadd.f32 0.0, %v439
        %441 = vdwg.mxu0
        %v442 = vadd.f32 %v310, %v400
        %v443 = vadd.f32 %v330, %v420
        %v444 = vadd.f32 %v350, %v440
        %v445 = vld [vmem:[%s182] sm:$0xff]
        %v446 = vld [vmem:[%s182 + $0x8] sm:$0xf]
        %s447 = scalar_lea.vmem %s1, 24
        %v448 = vld [vmem:[%s447] sm:$0xff]
        %451 = vst [vmem:[#allocation1] ss:$2 sm:$0xff] %v445
        %s452 = scalar_lea.vmem [#allocation1], 16
        %453 = vst [vmem:[%s452] ss:$2 sm:$0xff] %v446
        %v454 = vld.sshfl [vmem:[#allocation1] sm:$0xff pattern:$0x75316420]
        %v455 = vld.sshfl [vmem:[#allocation1 + $0x8] sm:$0xff pattern:$0x75316420]
        %v456 = vld.sshfl [vmem:[#allocation1 + $0x10] sm:$0xff pattern:$0x75316420]
        %457 = vrot.lane.b32.xlu0 %v454, 110
        %v458 = vpop.permute.xlu0 %457
        %459 = vrot.lane.b32.xlu0 %v455, 110
        %v460 = vpop.permute.xlu0 %459
        %461 = vrot.lane.b32.xlu0 %v456, 110
        %v462 = vpop.permute.xlu0 %461
        %vm463 = vcmask 900096
        %v464 = vsel %vm463, %v458, %v460
        %v465 = vsel %vm463, %v460, %v462
        %v467 = vsel %vm206, %v448, 0
        %v469 = vsel %vm210, %v464, 0
        %v471 = vsel %vm210, %v465, 0
        %v473 = vsel %vm210, %v462, 0
        %475 = vmatpush.msra.mxu0 0.0
        %476 = vmatpush.msra.mxu0 0.0
        %477 = vmatpush.msra.mxu0 0.0
        %478 = vmatpush.msra.mxu0 0.0
        %479 = vmatpush.msra.mxu0 0.0
        %480 = vmatpush.msra.mxu0 0.0
        %481 = vmatpush.msra.mxu0 0.0
        %482 = vmatpush.msra.mxu0 0.0
        %483 = vmatpush.msra.mxu0 0.0
        %484 = vmatpush.msra.mxu0 0.0
        %485 = vmatpush.msra.mxu0 0.0
        %486 = vmatpush.msra.mxu0 0.0
        %487 = vmatpush.msra.mxu0 0.0
        %488 = vmatpush.msra.mxu0 0.0
        %489 = vmatpush.msra.mxu0 0.0
        %490 = vmatpush.msra.mxu0 %v469
        %491 = vmatmul.f32.gmra.mxu0 %v467
        %v492 = vpop.f32.mrf.mxu0
        %v493 = vadd.f32 0.0, %v492
        %494 = vdwg.mxu0
        %495 = vmatpush.msra.mxu0 0.0
        %496 = vmatpush.msra.mxu0 0.0
        %497 = vmatpush.msra.mxu0 0.0
        %498 = vmatpush.msra.mxu0 0.0
        %499 = vmatpush.msra.mxu0 0.0
        %500 = vmatpush.msra.mxu0 0.0
        %501 = vmatpush.msra.mxu0 0.0
        %502 = vmatpush.msra.mxu0 0.0
        %503 = vmatpush.msra.mxu0 0.0
        %504 = vmatpush.msra.mxu0 0.0
        %505 = vmatpush.msra.mxu0 0.0
        %506 = vmatpush.msra.mxu0 0.0
        %507 = vmatpush.msra.mxu0 0.0
        %508 = vmatpush.msra.mxu0 0.0
        %509 = vmatpush.msra.mxu0 0.0
        %510 = vmatpush.msra.mxu0 %v471
        %511 = vmatmul.f32.gmra.mxu0 %v467
        %v512 = vpop.f32.mrf.mxu0
        %v513 = vadd.f32 0.0, %v512
        %514 = vdwg.mxu0
        %515 = vmatpush.msra.mxu0 0.0
        %516 = vmatpush.msra.mxu0 0.0
        %517 = vmatpush.msra.mxu0 0.0
        %518 = vmatpush.msra.mxu0 0.0
        %519 = vmatpush.msra.mxu0 0.0
        %520 = vmatpush.msra.mxu0 0.0
        %521 = vmatpush.msra.mxu0 0.0
        %522 = vmatpush.msra.mxu0 0.0
        %523 = vmatpush.msra.mxu0 0.0
        %524 = vmatpush.msra.mxu0 0.0
        %525 = vmatpush.msra.mxu0 0.0
        %526 = vmatpush.msra.mxu0 0.0
        %527 = vmatpush.msra.mxu0 0.0
        %528 = vmatpush.msra.mxu0 0.0
        %529 = vmatpush.msra.mxu0 0.0
        %530 = vmatpush.msra.mxu0 %v473
        %531 = vmatmul.f32.gmra.mxu0 %v467
        %v532 = vpop.f32.mrf.mxu0
        %v533 = vadd.f32 0.0, %v532
        %534 = vdwg.mxu0
        %v535 = vadd.f32 %v442, %v493
        %v536 = vadd.f32 %v443, %v513
        %v537 = vadd.f32 %v444, %v533
        %v538 = vld [vmem:[%s182] sm:$0xff]
        %v539 = vld [vmem:[%s182 + $0x8] sm:$0xf]
        %s540 = scalar_lea.vmem %s1, 32
        %v541 = vld [vmem:[%s540] sm:$0xff]
        %544 = vst [vmem:[#allocation1] ss:$2 sm:$0xff] %v538
        %s545 = scalar_lea.vmem [#allocation1], 16
        %546 = vst [vmem:[%s545] ss:$2 sm:$0xff] %v539
        %v547 = vld.sshfl [vmem:[#allocation1] sm:$0xff pattern:$0x75316420]
        %v548 = vld.sshfl [vmem:[#allocation1 + $0x8] sm:$0xff pattern:$0x75316420]
        %v549 = vld.sshfl [vmem:[#allocation1 + $0x10] sm:$0xff pattern:$0x75316420]
        %550 = vrot.lane.b32.xlu0 %v547, 109
        %v551 = vpop.permute.xlu0 %550
        %552 = vrot.lane.b32.xlu0 %v548, 109
        %v553 = vpop.permute.xlu0 %552
        %554 = vrot.lane.b32.xlu0 %v549, 109
        %v555 = vpop.permute.xlu0 %554
        %vm556 = vcmask 891904
        %v557 = vsel %vm556, %v551, %v553
        %v558 = vsel %vm556, %v553, %v555
        %v560 = vsel %vm206, %v541, 0
        %v562 = vsel %vm210, %v557, 0
        %v564 = vsel %vm210, %v558, 0
        %v566 = vsel %vm210, %v555, 0
        %568 = vmatpush.msra.mxu0 0.0
        %569 = vmatpush.msra.mxu0 0.0
        %570 = vmatpush.msra.mxu0 0.0
        %571 = vmatpush.msra.mxu0 0.0
        %572 = vmatpush.msra.mxu0 0.0
        %573 = vmatpush.msra.mxu0 0.0
        %574 = vmatpush.msra.mxu0 0.0
        %575 = vmatpush.msra.mxu0 0.0
        %576 = vmatpush.msra.mxu0 0.0
        %577 = vmatpush.msra.mxu0 0.0
        %578 = vmatpush.msra.mxu0 0.0
        %579 = vmatpush.msra.mxu0 0.0
        %580 = vmatpush.msra.mxu0 0.0
        %581 = vmatpush.msra.mxu0 0.0
        %582 = vmatpush.msra.mxu0 0.0
        %583 = vmatpush.msra.mxu0 %v562
        %584 = vmatmul.f32.gmra.mxu0 %v560
        %v585 = vpop.f32.mrf.mxu0
        %v586 = vadd.f32 0.0, %v585
        %587 = vdwg.mxu0
        %588 = vmatpush.msra.mxu0 0.0
        %589 = vmatpush.msra.mxu0 0.0
        %590 = vmatpush.msra.mxu0 0.0
        %591 = vmatpush.msra.mxu0 0.0
        %592 = vmatpush.msra.mxu0 0.0
        %593 = vmatpush.msra.mxu0 0.0
        %594 = vmatpush.msra.mxu0 0.0
        %595 = vmatpush.msra.mxu0 0.0
        %596 = vmatpush.msra.mxu0 0.0
        %597 = vmatpush.msra.mxu0 0.0
        %598 = vmatpush.msra.mxu0 0.0
        %599 = vmatpush.msra.mxu0 0.0
        %600 = vmatpush.msra.mxu0 0.0
        %601 = vmatpush.msra.mxu0 0.0
        %602 = vmatpush.msra.mxu0 0.0
        %603 = vmatpush.msra.mxu0 %v564
        %604 = vmatmul.f32.gmra.mxu0 %v560
        %v605 = vpop.f32.mrf.mxu0
        %v606 = vadd.f32 0.0, %v605
        %607 = vdwg.mxu0
        %608 = vmatpush.msra.mxu0 0.0
        %609 = vmatpush.msra.mxu0 0.0
        %610 = vmatpush.msra.mxu0 0.0
        %611 = vmatpush.msra.mxu0 0.0
        %612 = vmatpush.msra.mxu0 0.0
        %613 = vmatpush.msra.mxu0 0.0
        %614 = vmatpush.msra.mxu0 0.0
        %615 = vmatpush.msra.mxu0 0.0
        %616 = vmatpush.msra.mxu0 0.0
        %617 = vmatpush.msra.mxu0 0.0
        %618 = vmatpush.msra.mxu0 0.0
        %619 = vmatpush.msra.mxu0 0.0
        %620 = vmatpush.msra.mxu0 0.0
        %621 = vmatpush.msra.mxu0 0.0
        %622 = vmatpush.msra.mxu0 0.0
        %623 = vmatpush.msra.mxu0 %v566
        %624 = vmatmul.f32.gmra.mxu0 %v560
        %v625 = vpop.f32.mrf.mxu0
        %v626 = vadd.f32 0.0, %v625
        %627 = vdwg.mxu0
        %v628 = vadd.f32 %v535, %v586
        %v629 = vadd.f32 %v536, %v606
        %v630 = vadd.f32 %v537, %v626
        %v631 = vld [vmem:[%s182] sm:$0xff]
        %v632 = vld [vmem:[%s182 + $0x8] sm:$0xf]
        %s633 = scalar_lea.vmem %s1, 40
        %v634 = vld [vmem:[%s633] sm:$0xff]
        %637 = vst [vmem:[#allocation1] ss:$2 sm:$0xff] %v631
        %s638 = scalar_lea.vmem [#allocation1], 16
        %639 = vst [vmem:[%s638] ss:$2 sm:$0xff] %v632
        %v640 = vld.sshfl [vmem:[#allocation1] sm:$0xff pattern:$0x75316420]
        %v641 = vld.sshfl [vmem:[#allocation1 + $0x8] sm:$0xff pattern:$0x75316420]
        %v642 = vld.sshfl [vmem:[#allocation1 + $0x10] sm:$0xff pattern:$0x75316420]
        %643 = vrot.lane.b32.xlu0 %v640, 108
        %v644 = vpop.permute.xlu0 %643
        %645 = vrot.lane.b32.xlu0 %v641, 108
        %v646 = vpop.permute.xlu0 %645
        %647 = vrot.lane.b32.xlu0 %v642, 108
        %v648 = vpop.permute.xlu0 %647
        %vm649 = vcmask 883712
        %v650 = vsel %vm649, %v644, %v646
        %v651 = vsel %vm649, %v646, %v648
        %v653 = vsel %vm206, %v634, 0
        %v655 = vsel %vm210, %v650, 0
        %v657 = vsel %vm210, %v651, 0
        %v659 = vsel %vm210, %v648, 0
        %661 = vmatpush.msra.mxu0 0.0
        %662 = vmatpush.msra.mxu0 0.0
        %663 = vmatpush.msra.mxu0 0.0
        %664 = vmatpush.msra.mxu0 0.0
        %665 = vmatpush.msra.mxu0 0.0
        %666 = vmatpush.msra.mxu0 0.0
        %667 = vmatpush.msra.mxu0 0.0
        %668 = vmatpush.msra.mxu0 0.0
        %669 = vmatpush.msra.mxu0 0.0
        %670 = vmatpush.msra.mxu0 0.0
        %671 = vmatpush.msra.mxu0 0.0
        %672 = vmatpush.msra.mxu0 0.0
        %673 = vmatpush.msra.mxu0 0.0
        %674 = vmatpush.msra.mxu0 0.0
        %675 = vmatpush.msra.mxu0 0.0
        %676 = vmatpush.msra.mxu0 %v655
        %677 = vmatmul.f32.gmra.mxu0 %v653
        %v678 = vpop.f32.mrf.mxu0
        %v679 = vadd.f32 0.0, %v678
        %680 = vdwg.mxu0
        %681 = vmatpush.msra.mxu0 0.0
        %682 = vmatpush.msra.mxu0 0.0
        %683 = vmatpush.msra.mxu0 0.0
        %684 = vmatpush.msra.mxu0 0.0
        %685 = vmatpush.msra.mxu0 0.0
        %686 = vmatpush.msra.mxu0 0.0
        %687 = vmatpush.msra.mxu0 0.0
        %688 = vmatpush.msra.mxu0 0.0
        %689 = vmatpush.msra.mxu0 0.0
        %690 = vmatpush.msra.mxu0 0.0
        %691 = vmatpush.msra.mxu0 0.0
        %692 = vmatpush.msra.mxu0 0.0
        %693 = vmatpush.msra.mxu0 0.0
        %694 = vmatpush.msra.mxu0 0.0
        %695 = vmatpush.msra.mxu0 0.0
        %696 = vmatpush.msra.mxu0 %v657
        %697 = vmatmul.f32.gmra.mxu0 %v653
        %v698 = vpop.f32.mrf.mxu0
        %v699 = vadd.f32 0.0, %v698
        %700 = vdwg.mxu0
        %701 = vmatpush.msra.mxu0 0.0
        %702 = vmatpush.msra.mxu0 0.0
        %703 = vmatpush.msra.mxu0 0.0
        %704 = vmatpush.msra.mxu0 0.0
        %705 = vmatpush.msra.mxu0 0.0
        %706 = vmatpush.msra.mxu0 0.0
        %707 = vmatpush.msra.mxu0 0.0
        %708 = vmatpush.msra.mxu0 0.0
        %709 = vmatpush.msra.mxu0 0.0
        %710 = vmatpush.msra.mxu0 0.0
        %711 = vmatpush.msra.mxu0 0.0
        %712 = vmatpush.msra.mxu0 0.0
        %713 = vmatpush.msra.mxu0 0.0
        %714 = vmatpush.msra.mxu0 0.0
        %715 = vmatpush.msra.mxu0 0.0
        %716 = vmatpush.msra.mxu0 %v659
        %717 = vmatmul.f32.gmra.mxu0 %v653
        %v718 = vpop.f32.mrf.mxu0
        %v719 = vadd.f32 0.0, %v718
        %720 = vdwg.mxu0
        %v721 = vadd.f32 %v628, %v679
        %v722 = vadd.f32 %v629, %v699
        %v723 = vadd.f32 %v630, %v719
        %v724 = vld [vmem:[%s182] sm:$0xff]
        %v725 = vld [vmem:[%s182 + $0x8] sm:$0xf]
        %s726 = scalar_lea.vmem %s1, 48
        %v727 = vld [vmem:[%s726] sm:$0xff]
        %730 = vst [vmem:[#allocation1] ss:$2 sm:$0xff] %v724
        %s731 = scalar_lea.vmem [#allocation1], 16
        %732 = vst [vmem:[%s731] ss:$2 sm:$0xff] %v725
        %v733 = vld.sshfl [vmem:[#allocation1] sm:$0xff pattern:$0x75316420]
        %v734 = vld.sshfl [vmem:[#allocation1 + $0x8] sm:$0xff pattern:$0x75316420]
        %v735 = vld.sshfl [vmem:[#allocation1 + $0x10] sm:$0xff pattern:$0x75316420]
        %736 = vrot.lane.b32.xlu0 %v733, 92
        %v737 = vpop.permute.xlu0 %736
        %738 = vrot.lane.b32.xlu0 %v734, 92
        %v739 = vpop.permute.xlu0 %738
        %740 = vrot.lane.b32.xlu0 %v735, 92
        %v741 = vpop.permute.xlu0 %740
        %vm742 = vcmask 752640
        %v743 = vsel %vm742, %v737, %v739
        %v744 = vsel %vm742, %v739, %v741
        %v746 = vsel %vm206, %v727, 0
        %v748 = vsel %vm210, %v743, 0
        %v750 = vsel %vm210, %v744, 0
        %v752 = vsel %vm210, %v741, 0
        %754 = vmatpush.msra.mxu0 0.0
        %755 = vmatpush.msra.mxu0 0.0
        %756 = vmatpush.msra.mxu0 0.0
        %757 = vmatpush.msra.mxu0 0.0
        %758 = vmatpush.msra.mxu0 0.0
        %759 = vmatpush.msra.mxu0 0.0
        %760 = vmatpush.msra.mxu0 0.0
        %761 = vmatpush.msra.mxu0 0.0
        %762 = vmatpush.msra.mxu0 0.0
        %763 = vmatpush.msra.mxu0 0.0
        %764 = vmatpush.msra.mxu0 0.0
        %765 = vmatpush.msra.mxu0 0.0
        %766 = vmatpush.msra.mxu0 0.0
        %767 = vmatpush.msra.mxu0 0.0
        %768 = vmatpush.msra.mxu0 0.0
        %769 = vmatpush.msra.mxu0 %v748
        %770 = vmatmul.f32.gmra.mxu0 %v746
        %v771 = vpop.f32.mrf.mxu0
        %v772 = vadd.f32 0.0, %v771
        %773 = vdwg.mxu0
        %774 = vmatpush.msra.mxu0 0.0
        %775 = vmatpush.msra.mxu0 0.0
        %776 = vmatpush.msra.mxu0 0.0
        %777 = vmatpush.msra.mxu0 0.0
        %778 = vmatpush.msra.mxu0 0.0
        %779 = vmatpush.msra.mxu0 0.0
        %780 = vmatpush.msra.mxu0 0.0
        %781 = vmatpush.msra.mxu0 0.0
        %782 = vmatpush.msra.mxu0 0.0
        %783 = vmatpush.msra.mxu0 0.0
        %784 = vmatpush.msra.mxu0 0.0
        %785 = vmatpush.msra.mxu0 0.0
        %786 = vmatpush.msra.mxu0 0.0
        %787 = vmatpush.msra.mxu0 0.0
        %788 = vmatpush.msra.mxu0 0.0
        %789 = vmatpush.msra.mxu0 %v750
        %790 = vmatmul.f32.gmra.mxu0 %v746
        %v791 = vpop.f32.mrf.mxu0
        %v792 = vadd.f32 0.0, %v791
        %793 = vdwg.mxu0
        %794 = vmatpush.msra.mxu0 0.0
        %795 = vmatpush.msra.mxu0 0.0
        %796 = vmatpush.msra.mxu0 0.0
        %797 = vmatpush.msra.mxu0 0.0
        %798 = vmatpush.msra.mxu0 0.0
        %799 = vmatpush.msra.mxu0 0.0
        %800 = vmatpush.msra.mxu0 0.0
        %801 = vmatpush.msra.mxu0 0.0
        %802 = vmatpush.msra.mxu0 0.0
        %803 = vmatpush.msra.mxu0 0.0
        %804 = vmatpush.msra.mxu0 0.0
        %805 = vmatpush.msra.mxu0 0.0
        %806 = vmatpush.msra.mxu0 0.0
        %807 = vmatpush.msra.mxu0 0.0
        %808 = vmatpush.msra.mxu0 0.0
        %809 = vmatpush.msra.mxu0 %v752
        %810 = vmatmul.f32.gmra.mxu0 %v746
        %v811 = vpop.f32.mrf.mxu0
        %v812 = vadd.f32 0.0, %v811
        %813 = vdwg.mxu0
        %v814 = vadd.f32 %v721, %v772
        %v815 = vadd.f32 %v722, %v792
        %v816 = vadd.f32 %v723, %v812
        %v817 = vld [vmem:[%s182] sm:$0xff]
        %v818 = vld [vmem:[%s182 + $0x8] sm:$0xf]
        %s819 = scalar_lea.vmem %s1, 56
        %v820 = vld [vmem:[%s819] sm:$0xff]
        %823 = vst [vmem:[#allocation1] ss:$2 sm:$0xff] %v817
        %s824 = scalar_lea.vmem [#allocation1], 16
        %825 = vst [vmem:[%s824] ss:$2 sm:$0xff] %v818
        %v826 = vld.sshfl [vmem:[#allocation1] sm:$0xff pattern:$0x75316420]
        %v827 = vld.sshfl [vmem:[#allocation1 + $0x8] sm:$0xff pattern:$0x75316420]
        %v828 = vld.sshfl [vmem:[#allocation1 + $0x10] sm:$0xff pattern:$0x75316420]
        %829 = vrot.lane.b32.xlu0 %v826, 91
        %v830 = vpop.permute.xlu0 %829
        %831 = vrot.lane.b32.xlu0 %v827, 91
        %v832 = vpop.permute.xlu0 %831
        %833 = vrot.lane.b32.xlu0 %v828, 91
        %v834 = vpop.permute.xlu0 %833
        %vm835 = vcmask 744448
        %v836 = vsel %vm835, %v830, %v832
        %v837 = vsel %vm835, %v832, %v834
        %v839 = vsel %vm206, %v820, 0
        %v841 = vsel %vm210, %v836, 0
        %v843 = vsel %vm210, %v837, 0
        %v845 = vsel %vm210, %v834, 0
        %847 = vmatpush.msra.mxu0 0.0
        %848 = vmatpush.msra.mxu0 0.0
        %849 = vmatpush.msra.mxu0 0.0
        %850 = vmatpush.msra.mxu0 0.0
        %851 = vmatpush.msra.mxu0 0.0
        %852 = vmatpush.msra.mxu0 0.0
        %853 = vmatpush.msra.mxu0 0.0
        %854 = vmatpush.msra.mxu0 0.0
        %855 = vmatpush.msra.mxu0 0.0
        %856 = vmatpush.msra.mxu0 0.0
        %857 = vmatpush.msra.mxu0 0.0
        %858 = vmatpush.msra.mxu0 0.0
        %859 = vmatpush.msra.mxu0 0.0
        %860 = vmatpush.msra.mxu0 0.0
        %861 = vmatpush.msra.mxu0 0.0
        %862 = vmatpush.msra.mxu0 %v841
        %863 = vmatmul.f32.gmra.mxu0 %v839
        %v864 = vpop.f32.mrf.mxu0
        %v865 = vadd.f32 0.0, %v864
        %866 = vdwg.mxu0
        %867 = vmatpush.msra.mxu0 0.0
        %868 = vmatpush.msra.mxu0 0.0
        %869 = vmatpush.msra.mxu0 0.0
        %870 = vmatpush.msra.mxu0 0.0
        %871 = vmatpush.msra.mxu0 0.0
        %872 = vmatpush.msra.mxu0 0.0
        %873 = vmatpush.msra.mxu0 0.0
        %874 = vmatpush.msra.mxu0 0.0
        %875 = vmatpush.msra.mxu0 0.0
        %876 = vmatpush.msra.mxu0 0.0
        %877 = vmatpush.msra.mxu0 0.0
        %878 = vmatpush.msra.mxu0 0.0
        %879 = vmatpush.msra.mxu0 0.0
        %880 = vmatpush.msra.mxu0 0.0
        %881 = vmatpush.msra.mxu0 0.0
        %882 = vmatpush.msra.mxu0 %v843
        %883 = vmatmul.f32.gmra.mxu0 %v839
        %v884 = vpop.f32.mrf.mxu0
        %v885 = vadd.f32 0.0, %v884
        %886 = vdwg.mxu0
        %887 = vmatpush.msra.mxu0 0.0
        %888 = vmatpush.msra.mxu0 0.0
        %889 = vmatpush.msra.mxu0 0.0
        %890 = vmatpush.msra.mxu0 0.0
        %891 = vmatpush.msra.mxu0 0.0
        %892 = vmatpush.msra.mxu0 0.0
        %893 = vmatpush.msra.mxu0 0.0
        %894 = vmatpush.msra.mxu0 0.0
        %895 = vmatpush.msra.mxu0 0.0
        %896 = vmatpush.msra.mxu0 0.0
        %897 = vmatpush.msra.mxu0 0.0
        %898 = vmatpush.msra.mxu0 0.0
        %899 = vmatpush.msra.mxu0 0.0
        %900 = vmatpush.msra.mxu0 0.0
        %901 = vmatpush.msra.mxu0 0.0
        %902 = vmatpush.msra.mxu0 %v845
        %903 = vmatmul.f32.gmra.mxu0 %v839
        %v904 = vpop.f32.mrf.mxu0
        %v905 = vadd.f32 0.0, %v904
        %906 = vdwg.mxu0
        %v907 = vadd.f32 %v814, %v865
        %v908 = vadd.f32 %v815, %v885
        %v909 = vadd.f32 %v816, %v905
        %v910 = vld [vmem:[%s182] sm:$0xff]
        %v911 = vld [vmem:[%s182 + $0x8] sm:$0xf]
        %s912 = scalar_lea.vmem %s1, 64
        %v913 = vld [vmem:[%s912] sm:$0xff]
        %916 = vst [vmem:[#allocation1] ss:$2 sm:$0xff] %v910
        %s917 = scalar_lea.vmem [#allocation1], 16
        %918 = vst [vmem:[%s917] ss:$2 sm:$0xff] %v911
        %v919 = vld.sshfl [vmem:[#allocation1] sm:$0xff pattern:$0x75316420]
        %v920 = vld.sshfl [vmem:[#allocation1 + $0x8] sm:$0xff pattern:$0x75316420]
        %v921 = vld.sshfl [vmem:[#allocation1 + $0x10] sm:$0xff pattern:$0x75316420]
        %922 = vrot.lane.b32.xlu0 %v919, 90
        %v923 = vpop.permute.xlu0 %922
        %924 = vrot.lane.b32.xlu0 %v920, 90
        %v925 = vpop.permute.xlu0 %924
        %926 = vrot.lane.b32.xlu0 %v921, 90
        %v927 = vpop.permute.xlu0 %926
        %vm928 = vcmask 736256
        %v929 = vsel %vm928, %v923, %v925
        %v930 = vsel %vm928, %v925, %v927
        %v932 = vsel %vm206, %v913, 0
        %v934 = vsel %vm210, %v929, 0
        %v936 = vsel %vm210, %v930, 0
        %v938 = vsel %vm210, %v927, 0
        %940 = vmatpush.msra.mxu0 0.0
        %941 = vmatpush.msra.mxu0 0.0
        %942 = vmatpush.msra.mxu0 0.0
        %943 = vmatpush.msra.mxu0 0.0
        %944 = vmatpush.msra.mxu0 0.0
        %945 = vmatpush.msra.mxu0 0.0
        %946 = vmatpush.msra.mxu0 0.0
        %947 = vmatpush.msra.mxu0 0.0
        %948 = vmatpush.msra.mxu0 0.0
        %949 = vmatpush.msra.mxu0 0.0
        %950 = vmatpush.msra.mxu0 0.0
        %951 = vmatpush.msra.mxu0 0.0
        %952 = vmatpush.msra.mxu0 0.0
        %953 = vmatpush.msra.mxu0 0.0
        %954 = vmatpush.msra.mxu0 0.0
        %955 = vmatpush.msra.mxu0 %v934
        %956 = vmatmul.f32.gmra.mxu0 %v932
        %v957 = vpop.f32.mrf.mxu0
        %v958 = vadd.f32 0.0, %v957
        %959 = vdwg.mxu0
        %960 = vmatpush.msra.mxu0 0.0
        %961 = vmatpush.msra.mxu0 0.0
        %962 = vmatpush.msra.mxu0 0.0
        %963 = vmatpush.msra.mxu0 0.0
        %964 = vmatpush.msra.mxu0 0.0
        %965 = vmatpush.msra.mxu0 0.0
        %966 = vmatpush.msra.mxu0 0.0
        %967 = vmatpush.msra.mxu0 0.0
        %968 = vmatpush.msra.mxu0 0.0
        %969 = vmatpush.msra.mxu0 0.0
        %970 = vmatpush.msra.mxu0 0.0
        %971 = vmatpush.msra.mxu0 0.0
        %972 = vmatpush.msra.mxu0 0.0
        %973 = vmatpush.msra.mxu0 0.0
        %974 = vmatpush.msra.mxu0 0.0
        %975 = vmatpush.msra.mxu0 %v936
        %976 = vmatmul.f32.gmra.mxu0 %v932
        %v977 = vpop.f32.mrf.mxu0
        %v978 = vadd.f32 0.0, %v977
        %979 = vdwg.mxu0
        %980 = vmatpush.msra.mxu0 0.0
        %981 = vmatpush.msra.mxu0 0.0
        %982 = vmatpush.msra.mxu0 0.0
        %983 = vmatpush.msra.mxu0 0.0
        %984 = vmatpush.msra.mxu0 0.0
        %985 = vmatpush.msra.mxu0 0.0
        %986 = vmatpush.msra.mxu0 0.0
        %987 = vmatpush.msra.mxu0 0.0
        %988 = vmatpush.msra.mxu0 0.0
        %989 = vmatpush.msra.mxu0 0.0
        %990 = vmatpush.msra.mxu0 0.0
        %991 = vmatpush.msra.mxu0 0.0
        %992 = vmatpush.msra.mxu0 0.0
        %993 = vmatpush.msra.mxu0 0.0
        %994 = vmatpush.msra.mxu0 0.0
        %995 = vmatpush.msra.mxu0 %v938
        %996 = vmatmul.f32.gmra.mxu0 %v932
        %v997 = vpop.f32.mrf.mxu0
        %v998 = vadd.f32 0.0, %v997
        %999 = vdwg.mxu0
        %v1000 = vadd.f32 %v907, %v958
        %v1001 = vadd.f32 %v908, %v978
        %v1002 = vadd.f32 %v909, %v998
        %v1003 = vld [vmem:[%s2] sm:$0xff]
        %1005 = vset.pattern.permute.xlu0 0
        %1006 = vperm.xlu0 %1005, %v1003
        %v1007 = vpop.permute.xlu0 %1006
        %v1009 = vadd.f32 %v1000, %v1007
        %v1010 = vadd.f32 %v1001, %v1007
        %v1011 = vadd.f32 %v1002, %v1007
        %v1012 = vmax.f32 %v1009, 0.0
        %v1013 = vmax.f32 %v1010, 0.0
        %v1014 = vmax.f32 %v1011, 0.0
        %v1015 = vmul.f32 %v1012, 0.5
        %v1016 = vmul.f32 %v1013, 0.5
        %v1017 = vmul.f32 %v1014, 0.5
        %v1018 = vsub.f32 %v1015, 0.25
        %v1019 = vsub.f32 %v1016, 0.25
        %v1020 = vsub.f32 %v1017, 0.25
        %v1021 = vtanh.pop %v1018
        %v1022 = vtanh.pop %v1019
        %v1023 = vtanh.pop %v1020
        %v1024 = vmul.f32 %v1021, 0.5
        %v1025 = vmul.f32 %v1022, 0.5
        %v1026 = vmul.f32 %v1023, 0.5
        %v1027 = vadd.f32 %v1024, 2.0
        %v1028 = vadd.f32 %v1025, 2.0
        %v1029 = vadd.f32 %v1026, 2.0
        %v1030 = vsub.f32 %v1015, 0.75
        %v1031 = vsub.f32 %v1016, 0.75
        %v1032 = vsub.f32 %v1017, 0.75
        %v1033 = vtanh.pop %v1030
        %v1034 = vtanh.pop %v1031
        %v1035 = vtanh.pop %v1032
        %v1036 = vmul.f32 %v1033, 0.5
        %v1037 = vmul.f32 %v1034, 0.5
        %v1038 = vmul.f32 %v1035, 0.5
        %v1039 = vadd.f32 %v1027, %v1036
        %v1040 = vadd.f32 %v1028, %v1037
        %v1041 = vadd.f32 %v1029, %v1038
        %v1042 = vsub.f32 %v1015, 1.5
        %v1043 = vsub.f32 %v1016, 1.5
        %v1044 = vsub.f32 %v1017, 1.5
        %v1045 = vtanh.pop %v1042
        %v1046 = vtanh.pop %v1043
        %v1047 = vtanh.pop %v1044
        %v1048 = vadd.f32 %v1039, %v1045
        %v1049 = vadd.f32 %v1040, %v1046
        %v1050 = vadd.f32 %v1041, %v1047
        %1051 = vst [vmem:[%s177] sm:$0xff] %v1048
        %1052 = vst [vmem:[%s177 + $0x8] sm:$0xff] %v1049
        %vm1053 = vcmask 261120
        %1054 = vst.msk [vmem:[%s177 + $0x10] sm:$0xff] %vm1053, %v1050
        %s1055 = sand.u32 %s107, 1
        %s1056 = scalar_lea.sflag [#allocation3], %s1055
        %s1057 = sand.u32 %s107, 1
        %s1058 = smul.addr %s1057, 24
        %s1059 = scalar_lea.vmem [#allocation2], %s1058
        // Predicated region
        $region33: #{tpu_custom_call.1} parent=31 // pred_check
          %p1060 = pneg %p117
        $region34: #{tpu_custom_call.1} parent=31 // pred_check_branch
          %1062 = sbr.rel (%p1060) target = $region36
        $region35: #{tpu_custom_call.1} parent=31 // pred_region
          %s1063 = smul.u32 3, %s22
          %1065 = vsyncadd %s1056, 0
          %s1066 = smul.addr %s21, 3
          %s1067 = sadd.s32 %s1063, %s1066
          %s1068 = smul.addr %s1067, 8
          %s1069 = scalar_lea.hbm %s3, %s1068
          %s1071 = sshll.u32 %s1059, 4
          %s1072 = int_to_ptr.vmem [resolvable:$true] %s1071
          %s1073 = sshll.u32 %s1069, 4
          %s1074 = int_to_ptr.hbm [resolvable:$true] %s1073
          %1076 = dma.vmem_to_hbm [thread:$0]  %s1072, 384, %s1074, %s1056
        $region36: #{tpu_custom_call.1} parent=31 // pred_fallthru
          _
      $region32: #{tpu_custom_call.1} parent=5 // pred_fallthru
        _
      %p1077 = scmp.le.s32.totalorder 2, %s12
      // Predicated region
      $region37: #{tpu_custom_call.1} parent=5 // pred_check
        %p1078 = pneg %p1077
      $region38: #{tpu_custom_call.1} parent=5 // pred_check_branch
        %1080 = sbr.rel (%p1078) target = $region40
      $region39: #{tpu_custom_call.1} parent=5 // pred_region
        %s1081 = ssub.s32 %s12, 2
        // Predicated region
        $region41: #{tpu_custom_call.1} parent=39 // pred_check
          %p1082 = pneg %p123
        $region42: #{tpu_custom_call.1} parent=39 // pred_check_branch
          %1084 = sbr.rel (%p1082) target = $region44
        $region43: #{tpu_custom_call.1} parent=39 // pred_region
          %s1085 = sand.u32 %s108, 1
          %s1086 = scalar_lea.sflag [#allocation3], %s1085
          %s1087 = sand.u32 %s108, 1
          %s1088 = smul.addr %s1087, 24
          %s1089 = scalar_lea.vmem [#allocation2], %s1088
          %1091 = dma.done %s1086, 384
        $region44: #{tpu_custom_call.1} parent=39 // pred_fallthru
          _
      $region40: #{tpu_custom_call.1} parent=5 // pred_fallthru
        _
    $region6: #{tpu_custom_call.1} parent=1 // loop_footer
      %s16 = sadd.s32 1, %s12
    $region7: #{tpu_custom_call.1} parent=1 // loop_footer_branch
      %11 = sbr.rel target = $region3
    $region8: #{tpu_custom_call.1} parent=1 // loop_exit
      _
    %1092 = vsyncpa [#allocation3], 1
    %s1093 = scalar_lea.sflag [#allocation3], 1
    %1094 = vsyncpa %s1093, 1

</llo_original>
